<compile_context>
chip_gen: v7x
topology: tpu7x:2x2x1
jax: 0.10.0
libtpu: 0.0.40
codegen_flags: <defaults>
</compile_context>

<pallas_src>
import functools
import math

import jax
import jax.numpy as jnp
from jax import lax
from jax.experimental import pallas as pl
from jax.experimental.pallas import tpu as pltpu


# --------------------------------------------------------------------------- #
# Kernels
# --------------------------------------------------------------------------- #
def _sdpa_single_block_kernel(q_ref, k_ref, v_ref, o_ref, *, scale):
    """Whole Lk in one tile: plain (non-streaming) softmax, no scratch.

    q_ref: [G, tq, Dk]   k_ref: [G, Lk, Dk]   v_ref: [G, Lk, Dv]   o_ref: [G, tq, Dv]
    """
    q = q_ref[...]                       # native dtype -> MXU fast path
    k = k_ref[...]
    v = v_ref[...]

    # scores = (Q @ K^T) * scale, batched over folded head-group dim G.
    s = lax.dot_general(
        q, k,
        dimension_numbers=(((2,), (2,)), ((0,), (0,))),
        preferred_element_type=jnp.float32,
    ) * scale                                                # [G, tq, Lk] f32

    m = jnp.max(s, axis=-1, keepdims=True)                   # [G, tq, 1]
    p = jnp.exp(s - m)                                       # EUP
    l = jnp.sum(p, axis=-1, keepdims=True)                   # XLU reduce
    ctx = lax.dot_general(
        p.astype(v.dtype), v,
        dimension_numbers=(((2,), (1,)), ((0,), (0,))),
        preferred_element_type=jnp.float32,
    )                                                        # [G, tq, Dv] f32
    o_ref[...] = (ctx * pl.reciprocal(l, approx=True)).astype(o_ref.dtype)


def _flash_sdpa_kernel(q_ref, k_ref, v_ref, o_ref, m_sc, l_sc, acc_sc, *, scale):
    """Streaming (flash) softmax; grid axis 2 runs over Lk blocks.

    q_ref: [G, tq, Dk]   k_ref: [G, tk, Dk]   v_ref: [G, tk, Dv]   o_ref: [G, tq, Dv]
    """
    ki = pl.program_id(2)

    @pl.when(ki == 0)
    def _init():
        m_sc[...] = jnp.full_like(m_sc, -jnp.inf)
        l_sc[...] = jnp.zeros_like(l_sc)
        acc_sc[...] = jnp.zeros_like(acc_sc)

    q = q_ref[...]
    k = k_ref[...]
    v = v_ref[...]

    s = lax.dot_general(
        q, k,
        dimension_numbers=(((2,), (2,)), ((0,), (0,))),
        preferred_element_type=jnp.float32,
    ) * scale                                                # [G, tq, tk] f32

    # Online softmax update, all stats in f32.
    m_prev = m_sc[...]                                       # [G, tq, 1]
    m_new = jnp.maximum(m_prev, jnp.max(s, axis=-1, keepdims=True))
    alpha = jnp.exp(m_prev - m_new)                          # rescale old stats
    p = jnp.exp(s - m_new)                                   # [G, tq, tk] f32
    l_sc[...] = alpha * l_sc[...] + jnp.sum(p, axis=-1, keepdims=True)
    acc_sc[...] = alpha * acc_sc[...] + lax.dot_general(
        p.astype(v.dtype), v,
        dimension_numbers=(((2,), (1,)), ((0,), (0,))),
        preferred_element_type=jnp.float32,
    )
    m_sc[...] = m_new

    @pl.when(ki == pl.num_programs(2) - 1)
    def _finalize():
        inv_l = pl.reciprocal(l_sc[...], approx=True)        # EUP vrcp, free slot
        o_ref[...] = (acc_sc[...] * inv_l).astype(o_ref.dtype)


# --------------------------------------------------------------------------- #
# Tiling heuristics
# --------------------------------------------------------------------------- #
def _pick_block(n, preferred):
    """Largest power-of-two block <= preferred that divides n, else full n."""
    if n <= preferred:
        return n
    cand = preferred
    while cand >= 8:
        if n % cand == 0:
            return cand
        cand //= 2
    return n  # full extent always satisfies the (8,128) rule


def _pick_group(bh, lq, blk_q):
    """Fold several (batch, head) rows per grid step when per-head tiles are tiny."""
    if blk_q != lq:          # Lq is being tiled -> keep one head per step
        return 1
    for cand in (8, 4, 2):
        if bh % cand == 0 and cand * lq <= 512:
            return cand
    return 1


# --------------------------------------------------------------------------- #
# Wrapper
# --------------------------------------------------------------------------- #
def scaled_dot_product_attention(Q, K, V, d_k, *, block_q=256, block_k=512):
    """Pallas SDPA. Q:[B,H,Lq,Dk]  K:[B,H,Lk,Dk]  V:[B,H,Lk,Dv] -> [B,H,Lq,Dv]."""
    B, H, Lq, Dk = Q.shape
    _, _, Lk, _ = K.shape
    Dv = V.shape[-1]
    scale = 1.0 / math.sqrt(d_k)

    BH = B * H
    q = Q.reshape(BH, Lq, Dk)
    k = K.reshape(BH, Lk, Dk)
    v = V.reshape(BH, Lk, Dv)

    tq = _pick_block(Lq, block_q)
    tk = _pick_block(Lk, block_k)
    G = _pick_group(BH, Lq, tq)

    itemsize = jnp.dtype(Q.dtype).itemsize
    cost = pl.CostEstimate(
        flops=2 * BH * Lq * Lk * (Dk + Dv),
        transcendentals=BH * Lq * Lk,
        bytes_accessed=(BH * Lq * Dk + BH * Lk * Dk
                        + BH * Lk * Dv + BH * Lq * Dv) * itemsize,
    )
    # TODO(synk): for lane-density when Dv < 128, heads could additionally be packed
    # into the output's last dim (H*Dv); kept per-head layout to match the module.

    if tk == Lk:
        # ----- fast path: single Lk block, plain softmax, no scratch ----- #
        grid = (BH // G, Lq // tq)
        out = pl.pallas_call(
            functools.partial(_sdpa_single_block_kernel, scale=scale),
            out_shape=jax.ShapeDtypeStruct((BH, Lq, Dv), Q.dtype),
            grid_spec=pltpu.PrefetchScalarGridSpec(
                num_scalar_prefetch=0,
                grid=grid,
                in_specs=[
                    pl.BlockSpec((G, tq, Dk), lambda b, qi: (b, qi, 0)),
                    pl.BlockSpec((G, Lk, Dk), lambda b, qi: (b, 0, 0)),
                    pl.BlockSpec((G, Lk, Dv), lambda b, qi: (b, 0, 0)),
                ],
                out_specs=pl.BlockSpec((G, tq, Dv), lambda b, qi: (b, qi, 0)),
            ),
            compiler_params=pltpu.CompilerParams(
                dimension_semantics=("parallel", "parallel"),
                vmem_limit_bytes=32 * 1024 * 1024,
            ),
            cost_estimate=cost,
        )(q, k, v)
    else:
        # ----- flash path: Lk streamed as an 'arbitrary' reduction axis ----- #
        grid = (BH // G, Lq // tq, Lk // tk)
        out = pl.pallas_call(
            functools.partial(_flash_sdpa_kernel, scale=scale),
            out_shape=jax.ShapeDtypeStruct((BH, Lq, Dv), Q.dtype),
            grid_spec=pltpu.PrefetchScalarGridSpec(
                num_scalar_prefetch=0,
                grid=grid,
                in_specs=[
                    pl.BlockSpec((G, tq, Dk), lambda b, qi, ki: (b, qi, 0)),
                    pl.BlockSpec((G, tk, Dk), lambda b, qi, ki: (b, ki, 0)),
                    pl.BlockSpec((G, tk, Dv), lambda b, qi, ki: (b, ki, 0)),
                ],
                out_specs=pl.BlockSpec((G, tq, Dv), lambda b, qi, ki: (b, qi, 0)),
                scratch_shapes=[
                    pltpu.VMEM((G, tq, 1), jnp.float32),   # running row max
                    pltpu.VMEM((G, tq, 1), jnp.float32),   # running softmax denom
                    pltpu.VMEM((G, tq, Dv), jnp.float32),  # f32 output accumulator
                ],
            ),
            compiler_params=pltpu.CompilerParams(
                dimension_semantics=("parallel", "parallel", "arbitrary"),
                vmem_limit_bytes=32 * 1024 * 1024,
            ),
            cost_estimate=cost,
        )(q, k, v)

    return out.reshape(B, H, Lq, Dv)


# --------------------------------------------------------------------------- #
# Reference + self-test
# --------------------------------------------------------------------------- #
def _reference(Q, K, V, d_k):
    scores = jnp.einsum("bhqd,bhkd->bhqk", Q, K) / jnp.sqrt(jnp.float32(d_k))
    attn = jax.nn.softmax(scores, axis=-1)
    return jnp.einsum("bhqk,bhkv->bhqv", attn, V)


if __name__ == "__main__":
    key = jax.random.PRNGKey(0)

    # --- Test 1: module-consistent small shapes (fast single-block path) --- #
    B, H, L, Dk, Dv = 2, 4, 8, 32, 32
    kq, kk, kv, key = jax.random.split(key, 4)
    Q = jax.random.normal(kq, (B, H, L, Dk), dtype=jnp.float32)
    K = jax.random.normal(kk, (B, H, L, Dk), dtype=jnp.float32)
    V = jax.random.normal(kv, (B, H, L, Dv), dtype=jnp.float32)

    out = jax.block_until_ready(scaled_dot_product_attention(Q, K, V, Dk))
    ref = _reference(Q, K, V, Dk)
    assert out.shape == (B, H, L, Dv), out.shape
    # approx=True reciprocal (EUP) -> slightly looser tolerance than exact.
    assert jnp.allclose(out, ref, atol=2e-3, rtol=2e-3), "fast-path mismatch"

    # --- Test 2: exercise the streaming (flash) path with a tiled Lk axis --- #
    B2, H2, Lq2, Lk2, Dk2, Dv2 = 1, 2, 128, 256, 64, 64
    kq, kk, kv, key = jax.random.split(key, 4)
    Q2 = jax.random.normal(kq, (B2, H2, Lq2, Dk2), dtype=jnp.float32)
    K2 = jax.random.normal(kk, (B2, H2, Lk2, Dk2), dtype=jnp.float32)
    V2 = jax.random.normal(kv, (B2, H2, Lk2, Dv2), dtype=jnp.float32)

    out2 = jax.block_until_ready(
        scaled_dot_product_attention(Q2, K2, V2, Dk2, block_q=64, block_k=128))
    ref2 = _reference(Q2, K2, V2, Dk2)
    assert out2.shape == (B2, H2, Lq2, Dv2), out2.shape
    assert jnp.allclose(out2, ref2, atol=2e-3, rtol=2e-3), "flash-path mismatch"

    print("KERNEL_OK")
</pallas_src>

<mosaic_0001>
module attributes {stable_mosaic.version = 11 : i64} {
  func.func @_sdpa_single_block_kernel(%arg0: i32, %arg1: i32, %arg2: memref<8x8x32xf32, #tpu.memory_space<vmem>>, %arg3: memref<8x8x32xf32, #tpu.memory_space<vmem>>, %arg4: memref<8x8x32xf32, #tpu.memory_space<vmem>>, %arg5: memref<8x8x32xf32, #tpu.memory_space<vmem>>) attributes {dimension_semantics = [#tpu.dimension_semantics<parallel>, #tpu.dimension_semantics<parallel>], iteration_bounds = array<i64: 1, 1>, scalar_prefetch = 0 : i64, scratch_operands = 0 : i64, tpu.core_type = #tpu.core_type<tc>, window_params = [{transform_indices = @transform_0, window_bounds = array<i64: 8, 8, 32>}, {transform_indices = @transform_1, window_bounds = array<i64: 8, 8, 32>}, {transform_indices = @transform_2, window_bounds = array<i64: 8, 8, 32>}, {transform_indices = @transform_3, window_bounds = array<i64: 8, 8, 32>}]} {
    %c0 = arith.constant 0 : index
    %c0_0 = arith.constant 0 : index
    %c0_1 = arith.constant 0 : index
    %0 = vector.load %arg2[%c0, %c0_0, %c0_1] : memref<8x8x32xf32, #tpu.memory_space<vmem>>, vector<8x8x32xf32>
    %c0_2 = arith.constant 0 : index
    %c0_3 = arith.constant 0 : index
    %c0_4 = arith.constant 0 : index
    %1 = vector.load %arg3[%c0_2, %c0_3, %c0_4] : memref<8x8x32xf32, #tpu.memory_space<vmem>>, vector<8x8x32xf32>
    %c0_5 = arith.constant 0 : index
    %c0_6 = arith.constant 0 : index
    %c0_7 = arith.constant 0 : index
    %2 = vector.load %arg4[%c0_5, %c0_6, %c0_7] : memref<8x8x32xf32, #tpu.memory_space<vmem>>, vector<8x8x32xf32>
    %cst = arith.constant dense<0.000000e+00> : vector<8x8x8xf32>
    %3 = tpu.matmul %0, %1, %cst {dimension_numbers = #tpu.dot_dimension_numbers<[2], [2], [1], [1], [0, 0, 0, 1, 1, 1], [0], [0]>} : vector<8x8x32xf32>, vector<8x8x32xf32>, vector<8x8x8xf32> -> vector<8x8x8xf32>
    %cst_8 = arith.constant 0.176776692 : f32
    %4 = vector.broadcast %cst_8 : f32 to vector<8x8x8xf32>
    %5 = arith.mulf %3, %4 : vector<8x8x8xf32>
    %cst_9 = arith.constant dense<0xFF800000> : vector<8x8xf32>
    %6 = vector.multi_reduction <maximumf>, %5, %cst_9 [2] : vector<8x8x8xf32> to vector<8x8xf32>
    %7 = vector.shape_cast %6 : vector<8x8xf32> to vector<8x8x1xf32>
    %8 = vector.broadcast %7 : vector<8x8x1xf32> to vector<8x8x8xf32>
    %9 = arith.subf %5, %8 : vector<8x8x8xf32>
    %10 = math.exp %9 : vector<8x8x8xf32>
    %cst_10 = arith.constant dense<0.000000e+00> : vector<8x8xf32>
    %11 = vector.multi_reduction <add>, %10, %cst_10 [2] : vector<8x8x8xf32> to vector<8x8xf32>
    %12 = vector.shape_cast %11 : vector<8x8xf32> to vector<8x8x1xf32>
    %cst_11 = arith.constant dense<0.000000e+00> : vector<8x8x32xf32>
    %13 = tpu.matmul %10, %2, %cst_11 {dimension_numbers = #tpu.dot_dimension_numbers<[2], [1], [1], [2], [0, 0, 0, 1, 1, 2], [0], [0]>} : vector<8x8x8xf32>, vector<8x8x32xf32>, vector<8x8x32xf32> -> vector<8x8x32xf32>
    %14 = tpu.reciprocal %12 {approx = true} : vector<8x8x1xf32> -> vector<8x8x1xf32>
    %15 = vector.broadcast %14 : vector<8x8x1xf32> to vector<8x8x32xf32>
    %16 = arith.mulf %13, %15 : vector<8x8x32xf32>
    %c0_12 = arith.constant 0 : index
    %c0_13 = arith.constant 0 : index
    %c0_14 = arith.constant 0 : index
    %17 = vector.load %arg5[%c0_12, %c0_13, %c0_14] : memref<8x8x32xf32, #tpu.memory_space<vmem>>, vector<8x8x32xf32>
    tpu.vector_store %arg5[%c0_12, %c0_13, %c0_14], %16 {strides = array<i32>} : memref<8x8x32xf32, #tpu.memory_space<vmem>>, vector<8x8x32xf32>,
    return
  }
  func.func @transform_0(%arg0: i32, %arg1: i32) -> (i32, i32, i32) {
    %c0_i32 = arith.constant 0 : i32
    %c0_i32_0 = arith.constant 0 : i32
    return %arg0, %arg1, %c0_i32 : i32, i32, i32
  }
  func.func @transform_1(%arg0: i32, %arg1: i32) -> (i32, i32, i32) {
    %c0_i32 = arith.constant 0 : i32
    %c0_i32_0 = arith.constant 0 : i32
    %c0_i32_1 = arith.constant 0 : i32
    return %arg0, %c0_i32, %c0_i32_0 : i32, i32, i32
  }
  func.func @transform_2(%arg0: i32, %arg1: i32) -> (i32, i32, i32) {
    %c0_i32 = arith.constant 0 : i32
    %c0_i32_0 = arith.constant 0 : i32
    %c0_i32_1 = arith.constant 0 : i32
    return %arg0, %c0_i32, %c0_i32_0 : i32, i32, i32
  }
  func.func @transform_3(%arg0: i32, %arg1: i32) -> (i32, i32, i32) {
    %c0_i32 = arith.constant 0 : i32
    %c0_i32_0 = arith.constant 0 : i32
    return %arg0, %arg1, %c0_i32 : i32, i32, i32
  }
}

</mosaic_0001>

<llo_original>
// kernel: tpu_custom_call.1
$region0: #{tpu_custom_call.1}
  #allocation0 [shape = 'u32[]', space=smem, size = 0x4, offset = 0x4, fixed_abs, tag = 'smem constant byte address 0x4 - core index']
  #allocation1 [shape = 'u32[144,128]{1,0:T(1,128)}', space=vmem, size = 0x12000, scoped, tag = 'internal scratch']
  %s0 = inlined_call_operand.hbm [shape: f32[8,8,32], index: 0, kind: input, shape index: {}]
  %s1 = inlined_call_operand.hbm [shape: f32[8,8,32], index: 1, kind: input, shape index: {}]
  %s2 = inlined_call_operand.hbm [shape: f32[8,8,32], index: 2, kind: input, shape index: {}]
  %s3 = inlined_call_operand.hbm [shape: f32[8,8,32], index: 3, kind: output, shape index: {}]
  %s4 = sld [smem:[#allocation0]]
  $region34: #{tpu_custom_call.1} parent=0
    _
  %s6 = ssub.s32 1, %s4
  %s7 = scalar_select 0, %s6, %s4
  $region1: #{tpu_custom_call.1} parent=0
    #allocation2 [shape = 'u8[32768]{0}', space=vmem, size = 0x8000, scoped, tag = 'input window, operand 0, single buffered']
    #allocation3 [shape = 's32[1]{0}', space=sflag, size = 0x4, scoped, tag = 'scoped memory for tpu_custom_call.1']
    #allocation4 [shape = 's32[1]{0}', space=sflag, size = 0x4, scoped, tag = 'scoped memory for tpu_custom_call.1']
    #allocation5 [shape = 'u8[32768]{0}', space=vmem, size = 0x8000, scoped, tag = 'input window, operand 1, single buffered']
    #allocation6 [shape = 's32[1]{0}', space=sflag, size = 0x4, scoped, tag = 'scoped memory for tpu_custom_call.1']
    #allocation7 [shape = 'u8[32768]{0}', space=vmem, size = 0x8000, scoped, tag = 'input window, operand 2, single buffered']
    #allocation8 [shape = 'u8[32768]{0}', space=vmem, size = 0x8000, scoped, tag = 'output window, operand 0, single buffered']
    %8 = vsyncpa [#allocation3], 0
    %9 = vsyncpa [#allocation6], 0
    %10 = vsyncpa [#allocation4], 0
    // Predicated region
    $region2: #{tpu_custom_call.1} parent=1 // pred_check
      _
    $region3: #{tpu_custom_call.1} parent=1 // pred_check_branch
      %12 = sbr.rel (0) target = $region5
    $region4: #{tpu_custom_call.1} parent=1 // pred_region
      %s14 = ssub.s32 1024, 1024
      %15 = vsyncadd [#allocation3], %s14
      %s16 = sshll.u32 [#allocation2], 4
      %s17 = int_to_ptr.vmem [resolvable:$true] %s16
      %22 = dma.hbm_to_vmem [thread:$0]  %s0, 1024, %s17, [#allocation3], 128, 128, 8
    $region5: #{tpu_custom_call.1} parent=1 // pred_fallthru
      _
    // Predicated region
    $region6: #{tpu_custom_call.1} parent=1 // pred_check
      _
    $region7: #{tpu_custom_call.1} parent=1 // pred_check_branch
      %24 = sbr.rel (0) target = $region9
    $region8: #{tpu_custom_call.1} parent=1 // pred_region
      %s26 = ssub.s32 1024, 1024
      %27 = vsyncadd [#allocation6], %s26
      %s28 = sshll.u32 [#allocation5], 4
      %s29 = int_to_ptr.vmem [resolvable:$true] %s28
      %34 = dma.hbm_to_vmem [thread:$0]  %s1, 1024, %s29, [#allocation6], 128, 128, 8
    $region9: #{tpu_custom_call.1} parent=1 // pred_fallthru
      _
    // Predicated region
    $region10: #{tpu_custom_call.1} parent=1 // pred_check
      _
    $region11: #{tpu_custom_call.1} parent=1 // pred_check_branch
      %36 = sbr.rel (0) target = $region13
    $region12: #{tpu_custom_call.1} parent=1 // pred_region
      %s38 = ssub.s32 1024, 1024
      %39 = vsyncadd [#allocation6], %s38
      %s40 = sshll.u32 [#allocation7], 4
      %s41 = int_to_ptr.vmem [resolvable:$true] %s40
      %46 = dma.hbm_to_vmem [thread:$0]  %s2, 1024, %s41, [#allocation6], 128, 128, 8
    $region13: #{tpu_custom_call.1} parent=1 // pred_fallthru
      _
    // Predicated region
    $region14: #{tpu_custom_call.1} parent=1 // pred_check
      _
    $region15: #{tpu_custom_call.1} parent=1 // pred_check_branch
      %48 = sbr.rel (0) target = $region17
    $region16: #{tpu_custom_call.1} parent=1 // pred_region
      %49 = dma.done [#allocation3], 1024
    $region17: #{tpu_custom_call.1} parent=1 // pred_fallthru
      _
    // Predicated region
    $region18: #{tpu_custom_call.1} parent=1 // pred_check
      _
    $region19: #{tpu_custom_call.1} parent=1 // pred_check_branch
      %51 = sbr.rel (0) target = $region21
    $region20: #{tpu_custom_call.1} parent=1 // pred_region
      %52 = dma.done [#allocation6], 1024
    $region21: #{tpu_custom_call.1} parent=1 // pred_fallthru
      _
    // Predicated region
    $region22: #{tpu_custom_call.1} parent=1 // pred_check
      _
    $region23: #{tpu_custom_call.1} parent=1 // pred_check_branch
      %54 = sbr.rel (0) target = $region25
    $region24: #{tpu_custom_call.1} parent=1 // pred_region
      %55 = dma.done [#allocation6], 1024
    $region25: #{tpu_custom_call.1} parent=1 // pred_fallthru
      _
    %v56 = vld [vmem:[#allocation2] sm:$0xff]
    %v57 = vld [vmem:[#allocation2 + $0x8] sm:$0xff]
    %v58 = vld [vmem:[#allocation2 + $0x10] sm:$0xff]
    %v59 = vld [vmem:[#allocation2 + $0x18] sm:$0xff]
    %v60 = vld [vmem:[#allocation2 + $0x20] sm:$0xff]
    %v61 = vld [vmem:[#allocation2 + $0x28] sm:$0xff]
    %v62 = vld [vmem:[#allocation2 + $0x30] sm:$0xff]
    %v63 = vld [vmem:[#allocation2 + $0x38] sm:$0xff]
    %v64 = vld [vmem:[#allocation5] sm:$0xff]
    %v65 = vld [vmem:[#allocation5 + $0x8] sm:$0xff]
    %v66 = vld [vmem:[#allocation5 + $0x10] sm:$0xff]
    %v67 = vld [vmem:[#allocation5 + $0x18] sm:$0xff]
    %v68 = vld [vmem:[#allocation5 + $0x20] sm:$0xff]
    %v69 = vld [vmem:[#allocation5 + $0x28] sm:$0xff]
    %v70 = vld [vmem:[#allocation5 + $0x30] sm:$0xff]
    %v71 = vld [vmem:[#allocation5 + $0x38] sm:$0xff]
    %v72 = vld [vmem:[#allocation7] sm:$0xff]
    %v73 = vld [vmem:[#allocation7 + $0x8] sm:$0xff]
    %v74 = vld [vmem:[#allocation7 + $0x10] sm:$0xff]
    %v75 = vld [vmem:[#allocation7 + $0x18] sm:$0xff]
    %v76 = vld [vmem:[#allocation7 + $0x20] sm:$0xff]
    %v77 = vld [vmem:[#allocation7 + $0x28] sm:$0xff]
    %v78 = vld [vmem:[#allocation7 + $0x30] sm:$0xff]
    %v79 = vld [vmem:[#allocation7 + $0x38] sm:$0xff]
    %vm80 = vcmask 261120
    %v82 = vsel %vm80, %v56, 0
    %v85 = vsel %vm80, %v64, 0
    %87 = vmatprep.subr.mxu0 0.0
    %88 = vmatpush1.xpose.msra.mxu0 %v85
    %89 = vmatprep.subr.mxu0 0.0
    %90 = vmatpush1.xpose.msra.mxu0 0.0
    %91 = vmatprep.subr.mxu0 0.0
    %92 = vmatpush1.xpose.msra.mxu0 0.0
    %93 = vmatprep.subr.mxu0 0.0
    %94 = vmatpush1.xpose.msra.mxu0 0.0
    %95 = vmatprep.subr.mxu0 0.0
    %96 = vmatpush1.xpose.msra.mxu0 0.0
    %97 = vmatprep.subr.mxu0 0.0
    %98 = vmatpush1.xpose.msra.mxu0 0.0
    %99 = vmatprep.subr.mxu0 0.0
    %100 = vmatpush1.xpose.msra.mxu0 0.0
    %101 = vmatprep.subr.mxu0 0.0
    %102 = vmatpush1.xpose.msra.mxu0 0.0
    %103 = vmatprep.subr.mxu0 0.0
    %104 = vmatpush1.xpose.msra.mxu0 0.0
    %105 = vmatprep.subr.mxu0 0.0
    %106 = vmatpush1.xpose.msra.mxu0 0.0
    %107 = vmatprep.subr.mxu0 0.0
    %108 = vmatpush1.xpose.msra.mxu0 0.0
    %109 = vmatprep.subr.mxu0 0.0
    %110 = vmatpush1.xpose.msra.mxu0 0.0
    %111 = vmatprep.subr.mxu0 0.0
    %112 = vmatpush1.xpose.msra.mxu0 0.0
    %113 = vmatprep.subr.mxu0 0.0
    %114 = vmatpush1.xpose.msra.mxu0 0.0
    %115 = vmatprep.subr.mxu0 0.0
    %116 = vmatpush1.xpose.msra.mxu0 0.0
    %117 = vmatprep.subr.mxu0 0.0
    %118 = vmatpush1.xpose.msra.mxu0 0.0
    %119 = vmatprep.subr.mxu0 0.0
    %120 = vmatpush1.xpose.msra.mxu0 0.0
    %121 = vmatprep.subr.mxu0 0.0
    %122 = vmatpush1.xpose.msra.mxu0 0.0
    %123 = vmatprep.subr.mxu0 0.0
    %124 = vmatpush1.xpose.msra.mxu0 0.0
    %125 = vmatprep.subr.mxu0 0.0
    %126 = vmatpush1.xpose.msra.mxu0 0.0
    %127 = vmatprep.subr.mxu0 0.0
    %128 = vmatpush1.xpose.msra.mxu0 0.0
    %129 = vmatprep.subr.mxu0 0.0
    %130 = vmatpush1.xpose.msra.mxu0 0.0
    %131 = vmatprep.subr.mxu0 0.0
    %132 = vmatpush1.xpose.msra.mxu0 0.0
    %133 = vmatprep.subr.mxu0 0.0
    %134 = vmatpush1.xpose.msra.mxu0 0.0
    %135 = vmatprep.subr.mxu0 0.0
    %136 = vmatpush1.xpose.msra.mxu0 0.0
    %137 = vmatprep.subr.mxu0 0.0
    %138 = vmatpush1.xpose.msra.mxu0 0.0
    %139 = vmatprep.subr.mxu0 0.0
    %140 = vmatpush1.xpose.msra.mxu0 0.0
    %141 = vmatprep.subr.mxu0 0.0
    %142 = vmatpush1.xpose.msra.mxu0 0.0
    %143 = vmatprep.subr.mxu0 0.0
    %144 = vmatpush1.xpose.msra.mxu0 0.0
    %145 = vmatprep.subr.mxu0 0.0
    %146 = vmatpush1.xpose.msra.mxu0 0.0
    %147 = vmatprep.subr.mxu0 0.0
    %148 = vmatpush1.xpose.msra.mxu0 0.0
    %149 = vmatprep.subr.mxu0 0.0
    %150 = vmatpush1.xpose.msra.mxu0 0.0
    %151 = vmatprep.mubr.f32.mxu0 0.0
    %152 = vmatmul.mubr.f32.gmra.mrb[0].mxu0 %v82
    %v153 = vpop.f32.mrb[0].mxu0
    %v154 = vadd.f32 0.0, %v153
    %v155 = vpop.f32.mrb[0].mxu0
    %156 = vdwg.mxu0
    %v158 = vsel %vm80, %v57, 0
    %v161 = vsel %vm80, %v65, 0
    %163 = vmatprep.subr.mxu0 0.0
    %164 = vmatpush1.xpose.msra.mxu0 %v161
    %165 = vmatprep.subr.mxu0 0.0
    %166 = vmatpush1.xpose.msra.mxu0 0.0
    %167 = vmatprep.subr.mxu0 0.0
    %168 = vmatpush1.xpose.msra.mxu0 0.0
    %169 = vmatprep.subr.mxu0 0.0
    %170 = vmatpush1.xpose.msra.mxu0 0.0
    %171 = vmatprep.subr.mxu0 0.0
    %172 = vmatpush1.xpose.msra.mxu0 0.0
    %173 = vmatprep.subr.mxu0 0.0
    %174 = vmatpush1.xpose.msra.mxu0 0.0
    %175 = vmatprep.subr.mxu0 0.0
    %176 = vmatpush1.xpose.msra.mxu0 0.0
    %177 = vmatprep.subr.mxu0 0.0
    %178 = vmatpush1.xpose.msra.mxu0 0.0
    %179 = vmatprep.subr.mxu0 0.0
    %180 = vmatpush1.xpose.msra.mxu0 0.0
    %181 = vmatprep.subr.mxu0 0.0
    %182 = vmatpush1.xpose.msra.mxu0 0.0
    %183 = vmatprep.subr.mxu0 0.0
    %184 = vmatpush1.xpose.msra.mxu0 0.0
    %185 = vmatprep.subr.mxu0 0.0
    %186 = vmatpush1.xpose.msra.mxu0 0.0
    %187 = vmatprep.subr.mxu0 0.0
    %188 = vmatpush1.xpose.msra.mxu0 0.0
    %189 = vmatprep.subr.mxu0 0.0
    %190 = vmatpush1.xpose.msra.mxu0 0.0
    %191 = vmatprep.subr.mxu0 0.0
    %192 = vmatpush1.xpose.msra.mxu0 0.0
    %193 = vmatprep.subr.mxu0 0.0
    %194 = vmatpush1.xpose.msra.mxu0 0.0
    %195 = vmatprep.subr.mxu0 0.0
    %196 = vmatpush1.xpose.msra.mxu0 0.0
    %197 = vmatprep.subr.mxu0 0.0
    %198 = vmatpush1.xpose.msra.mxu0 0.0
    %199 = vmatprep.subr.mxu0 0.0
    %200 = vmatpush1.xpose.msra.mxu0 0.0
    %201 = vmatprep.subr.mxu0 0.0
    %202 = vmatpush1.xpose.msra.mxu0 0.0
    %203 = vmatprep.subr.mxu0 0.0
    %204 = vmatpush1.xpose.msra.mxu0 0.0
    %205 = vmatprep.subr.mxu0 0.0
    %206 = vmatpush1.xpose.msra.mxu0 0.0
    %207 = vmatprep.subr.mxu0 0.0
    %208 = vmatpush1.xpose.msra.mxu0 0.0
    %209 = vmatprep.subr.mxu0 0.0
    %210 = vmatpush1.xpose.msra.mxu0 0.0
    %211 = vmatprep.subr.mxu0 0.0
    %212 = vmatpush1.xpose.msra.mxu0 0.0
    %213 = vmatprep.subr.mxu0 0.0
    %214 = vmatpush1.xpose.msra.mxu0 0.0
    %215 = vmatprep.subr.mxu0 0.0
    %216 = vmatpush1.xpose.msra.mxu0 0.0
    %217 = vmatprep.subr.mxu0 0.0
    %218 = vmatpush1.xpose.msra.mxu0 0.0
    %219 = vmatprep.subr.mxu0 0.0
    %220 = vmatpush1.xpose.msra.mxu0 0.0
    %221 = vmatprep.subr.mxu0 0.0
    %222 = vmatpush1.xpose.msra.mxu0 0.0
    %223 = vmatprep.subr.mxu0 0.0
    %224 = vmatpush1.xpose.msra.mxu0 0.0
    %225 = vmatprep.subr.mxu0 0.0
    %226 = vmatpush1.xpose.msra.mxu0 0.0
    %227 = vmatprep.mubr.f32.mxu0 0.0
    %228 = vmatmul.mubr.f32.gmra.mrb[0].mxu0 %v158
    %v229 = vpop.f32.mrb[0].mxu0
    %v230 = vadd.f32 0.0, %v229
    %v231 = vpop.f32.mrb[0].mxu0
    %232 = vdwg.mxu0
    %v234 = vsel %vm80, %v58, 0
    %v237 = vsel %vm80, %v66, 0
    %239 = vmatprep.subr.mxu0 0.0
    %240 = vmatpush1.xpose.msra.mxu0 %v237
    %241 = vmatprep.subr.mxu0 0.0
    %242 = vmatpush1.xpose.msra.mxu0 0.0
    %243 = vmatprep.subr.mxu0 0.0
    %244 = vmatpush1.xpose.msra.mxu0 0.0
    %245 = vmatprep.subr.mxu0 0.0
    %246 = vmatpush1.xpose.msra.mxu0 0.0
    %247 = vmatprep.subr.mxu0 0.0
    %248 = vmatpush1.xpose.msra.mxu0 0.0
    %249 = vmatprep.subr.mxu0 0.0
    %250 = vmatpush1.xpose.msra.mxu0 0.0
    %251 = vmatprep.subr.mxu0 0.0
    %252 = vmatpush1.xpose.msra.mxu0 0.0
    %253 = vmatprep.subr.mxu0 0.0
    %254 = vmatpush1.xpose.msra.mxu0 0.0
    %255 = vmatprep.subr.mxu0 0.0
    %256 = vmatpush1.xpose.msra.mxu0 0.0
    %257 = vmatprep.subr.mxu0 0.0
    %258 = vmatpush1.xpose.msra.mxu0 0.0
    %259 = vmatprep.subr.mxu0 0.0
    %260 = vmatpush1.xpose.msra.mxu0 0.0
    %261 = vmatprep.subr.mxu0 0.0
    %262 = vmatpush1.xpose.msra.mxu0 0.0
    %263 = vmatprep.subr.mxu0 0.0
    %264 = vmatpush1.xpose.msra.mxu0 0.0
    %265 = vmatprep.subr.mxu0 0.0
    %266 = vmatpush1.xpose.msra.mxu0 0.0
    %267 = vmatprep.subr.mxu0 0.0
    %268 = vmatpush1.xpose.msra.mxu0 0.0
    %269 = vmatprep.subr.mxu0 0.0
    %270 = vmatpush1.xpose.msra.mxu0 0.0
    %271 = vmatprep.subr.mxu0 0.0
    %272 = vmatpush1.xpose.msra.mxu0 0.0
    %273 = vmatprep.subr.mxu0 0.0
    %274 = vmatpush1.xpose.msra.mxu0 0.0
    %275 = vmatprep.subr.mxu0 0.0
    %276 = vmatpush1.xpose.msra.mxu0 0.0
    %277 = vmatprep.subr.mxu0 0.0
    %278 = vmatpush1.xpose.msra.mxu0 0.0
    %279 = vmatprep.subr.mxu0 0.0
    %280 = vmatpush1.xpose.msra.mxu0 0.0
    %281 = vmatprep.subr.mxu0 0.0
    %282 = vmatpush1.xpose.msra.mxu0 0.0
    %283 = vmatprep.subr.mxu0 0.0
    %284 = vmatpush1.xpose.msra.mxu0 0.0
    %285 = vmatprep.subr.mxu0 0.0
    %286 = vmatpush1.xpose.msra.mxu0 0.0
    %287 = vmatprep.subr.mxu0 0.0
    %288 = vmatpush1.xpose.msra.mxu0 0.0
    %289 = vmatprep.subr.mxu0 0.0
    %290 = vmatpush1.xpose.msra.mxu0 0.0
    %291 = vmatprep.subr.mxu0 0.0
    %292 = vmatpush1.xpose.msra.mxu0 0.0
    %293 = vmatprep.subr.mxu0 0.0
    %294 = vmatpush1.xpose.msra.mxu0 0.0
    %295 = vmatprep.subr.mxu0 0.0
    %296 = vmatpush1.xpose.msra.mxu0 0.0
    %297 = vmatprep.subr.mxu0 0.0
    %298 = vmatpush1.xpose.msra.mxu0 0.0
    %299 = vmatprep.subr.mxu0 0.0
    %300 = vmatpush1.xpose.msra.mxu0 0.0
    %301 = vmatprep.subr.mxu0 0.0
    %302 = vmatpush1.xpose.msra.mxu0 0.0
    %303 = vmatprep.mubr.f32.mxu0 0.0
    %304 = vmatmul.mubr.f32.gmra.mrb[0].mxu0 %v234
    %v305 = vpop.f32.mrb[0].mxu0
    %v306 = vadd.f32 0.0, %v305
    %v307 = vpop.f32.mrb[0].mxu0
    %308 = vdwg.mxu0
    %v310 = vsel %vm80, %v59, 0
    %v313 = vsel %vm80, %v67, 0
    %315 = vmatprep.subr.mxu0 0.0
    %316 = vmatpush1.xpose.msra.mxu0 %v313
    %317 = vmatprep.subr.mxu0 0.0
    %318 = vmatpush1.xpose.msra.mxu0 0.0
    %319 = vmatprep.subr.mxu0 0.0
    %320 = vmatpush1.xpose.msra.mxu0 0.0
    %321 = vmatprep.subr.mxu0 0.0
    %322 = vmatpush1.xpose.msra.mxu0 0.0
    %323 = vmatprep.subr.mxu0 0.0
    %324 = vmatpush1.xpose.msra.mxu0 0.0
    %325 = vmatprep.subr.mxu0 0.0
    %326 = vmatpush1.xpose.msra.mxu0 0.0
    %327 = vmatprep.subr.mxu0 0.0
    %328 = vmatpush1.xpose.msra.mxu0 0.0
    %329 = vmatprep.subr.mxu0 0.0
    %330 = vmatpush1.xpose.msra.mxu0 0.0
    %331 = vmatprep.subr.mxu0 0.0
    %332 = vmatpush1.xpose.msra.mxu0 0.0
    %333 = vmatprep.subr.mxu0 0.0
    %334 = vmatpush1.xpose.msra.mxu0 0.0
    %335 = vmatprep.subr.mxu0 0.0
    %336 = vmatpush1.xpose.msra.mxu0 0.0
    %337 = vmatprep.subr.mxu0 0.0
    %338 = vmatpush1.xpose.msra.mxu0 0.0
    %339 = vmatprep.subr.mxu0 0.0
    %340 = vmatpush1.xpose.msra.mxu0 0.0
    %341 = vmatprep.subr.mxu0 0.0
    %342 = vmatpush1.xpose.msra.mxu0 0.0
    %343 = vmatprep.subr.mxu0 0.0
    %344 = vmatpush1.xpose.msra.mxu0 0.0
    %345 = vmatprep.subr.mxu0 0.0
    %346 = vmatpush1.xpose.msra.mxu0 0.0
    %347 = vmatprep.subr.mxu0 0.0
    %348 = vmatpush1.xpose.msra.mxu0 0.0
    %349 = vmatprep.subr.mxu0 0.0
    %350 = vmatpush1.xpose.msra.mxu0 0.0
    %351 = vmatprep.subr.mxu0 0.0
    %352 = vmatpush1.xpose.msra.mxu0 0.0
    %353 = vmatprep.subr.mxu0 0.0
    %354 = vmatpush1.xpose.msra.mxu0 0.0
    %355 = vmatprep.subr.mxu0 0.0
    %356 = vmatpush1.xpose.msra.mxu0 0.0
    %357 = vmatprep.subr.mxu0 0.0
    %358 = vmatpush1.xpose.msra.mxu0 0.0
    %359 = vmatprep.subr.mxu0 0.0
    %360 = vmatpush1.xpose.msra.mxu0 0.0
    %361 = vmatprep.subr.mxu0 0.0
    %362 = vmatpush1.xpose.msra.mxu0 0.0
    %363 = vmatprep.subr.mxu0 0.0
    %364 = vmatpush1.xpose.msra.mxu0 0.0
    %365 = vmatprep.subr.mxu0 0.0
    %366 = vmatpush1.xpose.msra.mxu0 0.0
    %367 = vmatprep.subr.mxu0 0.0
    %368 = vmatpush1.xpose.msra.mxu0 0.0
    %369 = vmatprep.subr.mxu0 0.0
    %370 = vmatpush1.xpose.msra.mxu0 0.0
    %371 = vmatprep.subr.mxu0 0.0
    %372 = vmatpush1.xpose.msra.mxu0 0.0
    %373 = vmatprep.subr.mxu0 0.0
    %374 = vmatpush1.xpose.msra.mxu0 0.0
    %375 = vmatprep.subr.mxu0 0.0
    %376 = vmatpush1.xpose.msra.mxu0 0.0
    %377 = vmatprep.subr.mxu0 0.0
    %378 = vmatpush1.xpose.msra.mxu0 0.0
    %379 = vmatprep.mubr.f32.mxu0 0.0
    %380 = vmatmul.mubr.f32.gmra.mrb[0].mxu0 %v310
    %v381 = vpop.f32.mrb[0].mxu0
    %v382 = vadd.f32 0.0, %v381
    %v383 = vpop.f32.mrb[0].mxu0
    %384 = vdwg.mxu0
    %v386 = vsel %vm80, %v60, 0
    %v389 = vsel %vm80, %v68, 0
    %391 = vmatprep.subr.mxu0 0.0
    %392 = vmatpush1.xpose.msra.mxu0 %v389
    %393 = vmatprep.subr.mxu0 0.0
    %394 = vmatpush1.xpose.msra.mxu0 0.0
    %395 = vmatprep.subr.mxu0 0.0
    %396 = vmatpush1.xpose.msra.mxu0 0.0
    %397 = vmatprep.subr.mxu0 0.0
    %398 = vmatpush1.xpose.msra.mxu0 0.0
    %399 = vmatprep.subr.mxu0 0.0
    %400 = vmatpush1.xpose.msra.mxu0 0.0
    %401 = vmatprep.subr.mxu0 0.0
    %402 = vmatpush1.xpose.msra.mxu0 0.0
    %403 = vmatprep.subr.mxu0 0.0
    %404 = vmatpush1.xpose.msra.mxu0 0.0
    %405 = vmatprep.subr.mxu0 0.0
    %406 = vmatpush1.xpose.msra.mxu0 0.0
    %407 = vmatprep.subr.mxu0 0.0
    %408 = vmatpush1.xpose.msra.mxu0 0.0
    %409 = vmatprep.subr.mxu0 0.0
    %410 = vmatpush1.xpose.msra.mxu0 0.0
    %411 = vmatprep.subr.mxu0 0.0
    %412 = vmatpush1.xpose.msra.mxu0 0.0
    %413 = vmatprep.subr.mxu0 0.0
    %414 = vmatpush1.xpose.msra.mxu0 0.0
    %415 = vmatprep.subr.mxu0 0.0
    %416 = vmatpush1.xpose.msra.mxu0 0.0
    %417 = vmatprep.subr.mxu0 0.0
    %418 = vmatpush1.xpose.msra.mxu0 0.0
    %419 = vmatprep.subr.mxu0 0.0
    %420 = vmatpush1.xpose.msra.mxu0 0.0
    %421 = vmatprep.subr.mxu0 0.0
    %422 = vmatpush1.xpose.msra.mxu0 0.0
    %423 = vmatprep.subr.mxu0 0.0
    %424 = vmatpush1.xpose.msra.mxu0 0.0
    %425 = vmatprep.subr.mxu0 0.0
    %426 = vmatpush1.xpose.msra.mxu0 0.0
    %427 = vmatprep.subr.mxu0 0.0
    %428 = vmatpush1.xpose.msra.mxu0 0.0
    %429 = vmatprep.subr.mxu0 0.0
    %430 = vmatpush1.xpose.msra.mxu0 0.0
    %431 = vmatprep.subr.mxu0 0.0
    %432 = vmatpush1.xpose.msra.mxu0 0.0
    %433 = vmatprep.subr.mxu0 0.0
    %434 = vmatpush1.xpose.msra.mxu0 0.0
    %435 = vmatprep.subr.mxu0 0.0
    %436 = vmatpush1.xpose.msra.mxu0 0.0
    %437 = vmatprep.subr.mxu0 0.0
    %438 = vmatpush1.xpose.msra.mxu0 0.0
    %439 = vmatprep.subr.mxu0 0.0
    %440 = vmatpush1.xpose.msra.mxu0 0.0
    %441 = vmatprep.subr.mxu0 0.0
    %442 = vmatpush1.xpose.msra.mxu0 0.0
    %443 = vmatprep.subr.mxu0 0.0
    %444 = vmatpush1.xpose.msra.mxu0 0.0
    %445 = vmatprep.subr.mxu0 0.0
    %446 = vmatpush1.xpose.msra.mxu0 0.0
    %447 = vmatprep.subr.mxu0 0.0
    %448 = vmatpush1.xpose.msra.mxu0 0.0
    %449 = vmatprep.subr.mxu0 0.0
    %450 = vmatpush1.xpose.msra.mxu0 0.0
    %451 = vmatprep.subr.mxu0 0.0
    %452 = vmatpush1.xpose.msra.mxu0 0.0
    %453 = vmatprep.subr.mxu0 0.0
    %454 = vmatpush1.xpose.msra.mxu0 0.0
    %455 = vmatprep.mubr.f32.mxu0 0.0
    %456 = vmatmul.mubr.f32.gmra.mrb[0].mxu0 %v386
    %v457 = vpop.f32.mrb[0].mxu0
    %v458 = vadd.f32 0.0, %v457
    %v459 = vpop.f32.mrb[0].mxu0
    %460 = vdwg.mxu0
    %v462 = vsel %vm80, %v61, 0
    %v465 = vsel %vm80, %v69, 0
    %467 = vmatprep.subr.mxu0 0.0
    %468 = vmatpush1.xpose.msra.mxu0 %v465
    %469 = vmatprep.subr.mxu0 0.0
    %470 = vmatpush1.xpose.msra.mxu0 0.0
    %471 = vmatprep.subr.mxu0 0.0
    %472 = vmatpush1.xpose.msra.mxu0 0.0
    %473 = vmatprep.subr.mxu0 0.0
    %474 = vmatpush1.xpose.msra.mxu0 0.0
    %475 = vmatprep.subr.mxu0 0.0
    %476 = vmatpush1.xpose.msra.mxu0 0.0
    %477 = vmatprep.subr.mxu0 0.0
    %478 = vmatpush1.xpose.msra.mxu0 0.0
    %479 = vmatprep.subr.mxu0 0.0
    %480 = vmatpush1.xpose.msra.mxu0 0.0
    %481 = vmatprep.subr.mxu0 0.0
    %482 = vmatpush1.xpose.msra.mxu0 0.0
    %483 = vmatprep.subr.mxu0 0.0
    %484 = vmatpush1.xpose.msra.mxu0 0.0
    %485 = vmatprep.subr.mxu0 0.0
    %486 = vmatpush1.xpose.msra.mxu0 0.0
    %487 = vmatprep.subr.mxu0 0.0
    %488 = vmatpush1.xpose.msra.mxu0 0.0
    %489 = vmatprep.subr.mxu0 0.0
    %490 = vmatpush1.xpose.msra.mxu0 0.0
    %491 = vmatprep.subr.mxu0 0.0
    %492 = vmatpush1.xpose.msra.mxu0 0.0
    %493 = vmatprep.subr.mxu0 0.0
    %494 = vmatpush1.xpose.msra.mxu0 0.0
    %495 = vmatprep.subr.mxu0 0.0
    %496 = vmatpush1.xpose.msra.mxu0 0.0
    %497 = vmatprep.subr.mxu0 0.0
    %498 = vmatpush1.xpose.msra.mxu0 0.0
    %499 = vmatprep.subr.mxu0 0.0
    %500 = vmatpush1.xpose.msra.mxu0 0.0
    %501 = vmatprep.subr.mxu0 0.0
    %502 = vmatpush1.xpose.msra.mxu0 0.0
    %503 = vmatprep.subr.mxu0 0.0
    %504 = vmatpush1.xpose.msra.mxu0 0.0
    %505 = vmatprep.subr.mxu0 0.0
    %506 = vmatpush1.xpose.msra.mxu0 0.0
    %507 = vmatprep.subr.mxu0 0.0
    %508 = vmatpush1.xpose.msra.mxu0 0.0
    %509 = vmatprep.subr.mxu0 0.0
    %510 = vmatpush1.xpose.msra.mxu0 0.0
    %511 = vmatprep.subr.mxu0 0.0
    %512 = vmatpush1.xpose.msra.mxu0 0.0
    %513 = vmatprep.subr.mxu0 0.0
    %514 = vmatpush1.xpose.msra.mxu0 0.0
    %515 = vmatprep.subr.mxu0 0.0
    %516 = vmatpush1.xpose.msra.mxu0 0.0
    %517 = vmatprep.subr.mxu0 0.0
    %518 = vmatpush1.xpose.msra.mxu0 0.0
    %519 = vmatprep.subr.mxu0 0.0
    %520 = vmatpush1.xpose.msra.mxu0 0.0
    %521 = vmatprep.subr.mxu0 0.0
    %522 = vmatpush1.xpose.msra.mxu0 0.0
    %523 = vmatprep.subr.mxu0 0.0
    %524 = vmatpush1.xpose.msra.mxu0 0.0
    %525 = vmatprep.subr.mxu0 0.0
    %526 = vmatpush1.xpose.msra.mxu0 0.0
    %527 = vmatprep.subr.mxu0 0.0
    %528 = vmatpush1.xpose.msra.mxu0 0.0
    %529 = vmatprep.subr.mxu0 0.0
    %530 = vmatpush1.xpose.msra.mxu0 0.0
    %531 = vmatprep.mubr.f32.mxu0 0.0
    %532 = vmatmul.mubr.f32.gmra.mrb[0].mxu0 %v462
    %v533 = vpop.f32.mrb[0].mxu0
    %v534 = vadd.f32 0.0, %v533
    %v535 = vpop.f32.mrb[0].mxu0
    %536 = vdwg.mxu0
    %v538 = vsel %vm80, %v62, 0
    %v541 = vsel %vm80, %v70, 0
    %543 = vmatprep.subr.mxu0 0.0
    %544 = vmatpush1.xpose.msra.mxu0 %v541
    %545 = vmatprep.subr.mxu0 0.0
    %546 = vmatpush1.xpose.msra.mxu0 0.0
    %547 = vmatprep.subr.mxu0 0.0
    %548 = vmatpush1.xpose.msra.mxu0 0.0
    %549 = vmatprep.subr.mxu0 0.0
    %550 = vmatpush1.xpose.msra.mxu0 0.0
    %551 = vmatprep.subr.mxu0 0.0
    %552 = vmatpush1.xpose.msra.mxu0 0.0
    %553 = vmatprep.subr.mxu0 0.0
    %554 = vmatpush1.xpose.msra.mxu0 0.0
    %555 = vmatprep.subr.mxu0 0.0
    %556 = vmatpush1.xpose.msra.mxu0 0.0
    %557 = vmatprep.subr.mxu0 0.0
    %558 = vmatpush1.xpose.msra.mxu0 0.0
    %559 = vmatprep.subr.mxu0 0.0
    %560 = vmatpush1.xpose.msra.mxu0 0.0
    %561 = vmatprep.subr.mxu0 0.0
    %562 = vmatpush1.xpose.msra.mxu0 0.0
    %563 = vmatprep.subr.mxu0 0.0
    %564 = vmatpush1.xpose.msra.mxu0 0.0
    %565 = vmatprep.subr.mxu0 0.0
    %566 = vmatpush1.xpose.msra.mxu0 0.0
    %567 = vmatprep.subr.mxu0 0.0
    %568 = vmatpush1.xpose.msra.mxu0 0.0
    %569 = vmatprep.subr.mxu0 0.0
    %570 = vmatpush1.xpose.msra.mxu0 0.0
    %571 = vmatprep.subr.mxu0 0.0
    %572 = vmatpush1.xpose.msra.mxu0 0.0
    %573 = vmatprep.subr.mxu0 0.0
    %574 = vmatpush1.xpose.msra.mxu0 0.0
    %575 = vmatprep.subr.mxu0 0.0
    %576 = vmatpush1.xpose.msra.mxu0 0.0
    %577 = vmatprep.subr.mxu0 0.0
    %578 = vmatpush1.xpose.msra.mxu0 0.0
    %579 = vmatprep.subr.mxu0 0.0
    %580 = vmatpush1.xpose.msra.mxu0 0.0
    %581 = vmatprep.subr.mxu0 0.0
    %582 = vmatpush1.xpose.msra.mxu0 0.0
    %583 = vmatprep.subr.mxu0 0.0
    %584 = vmatpush1.xpose.msra.mxu0 0.0
    %585 = vmatprep.subr.mxu0 0.0
    %586 = vmatpush1.xpose.msra.mxu0 0.0
    %587 = vmatprep.subr.mxu0 0.0
    %588 = vmatpush1.xpose.msra.mxu0 0.0
    %589 = vmatprep.subr.mxu0 0.0
    %590 = vmatpush1.xpose.msra.mxu0 0.0
    %591 = vmatprep.subr.mxu0 0.0
    %592 = vmatpush1.xpose.msra.mxu0 0.0
    %593 = vmatprep.subr.mxu0 0.0
    %594 = vmatpush1.xpose.msra.mxu0 0.0
    %595 = vmatprep.subr.mxu0 0.0
    %596 = vmatpush1.xpose.msra.mxu0 0.0
    %597 = vmatprep.subr.mxu0 0.0
    %598 = vmatpush1.xpose.msra.mxu0 0.0
    %599 = vmatprep.subr.mxu0 0.0
    %600 = vmatpush1.xpose.msra.mxu0 0.0
    %601 = vmatprep.subr.mxu0 0.0
    %602 = vmatpush1.xpose.msra.mxu0 0.0
    %603 = vmatprep.subr.mxu0 0.0
    %604 = vmatpush1.xpose.msra.mxu0 0.0
    %605 = vmatprep.subr.mxu0 0.0
    %606 = vmatpush1.xpose.msra.mxu0 0.0
    %607 = vmatprep.mubr.f32.mxu0 0.0
    %608 = vmatmul.mubr.f32.gmra.mrb[0].mxu0 %v538
    %v609 = vpop.f32.mrb[0].mxu0
    %v610 = vadd.f32 0.0, %v609
    %v611 = vpop.f32.mrb[0].mxu0
    %612 = vdwg.mxu0
    %v614 = vsel %vm80, %v63, 0
    %v617 = vsel %vm80, %v71, 0
    %619 = vmatprep.subr.mxu0 0.0
    %620 = vmatpush1.xpose.msra.mxu0 %v617
    %621 = vmatprep.subr.mxu0 0.0
    %622 = vmatpush1.xpose.msra.mxu0 0.0
    %623 = vmatprep.subr.mxu0 0.0
    %624 = vmatpush1.xpose.msra.mxu0 0.0
    %625 = vmatprep.subr.mxu0 0.0
    %626 = vmatpush1.xpose.msra.mxu0 0.0
    %627 = vmatprep.subr.mxu0 0.0
    %628 = vmatpush1.xpose.msra.mxu0 0.0
    %629 = vmatprep.subr.mxu0 0.0
    %630 = vmatpush1.xpose.msra.mxu0 0.0
    %631 = vmatprep.subr.mxu0 0.0
    %632 = vmatpush1.xpose.msra.mxu0 0.0
    %633 = vmatprep.subr.mxu0 0.0
    %634 = vmatpush1.xpose.msra.mxu0 0.0
    %635 = vmatprep.subr.mxu0 0.0
    %636 = vmatpush1.xpose.msra.mxu0 0.0
    %637 = vmatprep.subr.mxu0 0.0
    %638 = vmatpush1.xpose.msra.mxu0 0.0
    %639 = vmatprep.subr.mxu0 0.0
    %640 = vmatpush1.xpose.msra.mxu0 0.0
    %641 = vmatprep.subr.mxu0 0.0
    %642 = vmatpush1.xpose.msra.mxu0 0.0
    %643 = vmatprep.subr.mxu0 0.0
    %644 = vmatpush1.xpose.msra.mxu0 0.0
    %645 = vmatprep.subr.mxu0 0.0
    %646 = vmatpush1.xpose.msra.mxu0 0.0
    %647 = vmatprep.subr.mxu0 0.0
    %648 = vmatpush1.xpose.msra.mxu0 0.0
    %649 = vmatprep.subr.mxu0 0.0
    %650 = vmatpush1.xpose.msra.mxu0 0.0
    %651 = vmatprep.subr.mxu0 0.0
    %652 = vmatpush1.xpose.msra.mxu0 0.0
    %653 = vmatprep.subr.mxu0 0.0
    %654 = vmatpush1.xpose.msra.mxu0 0.0
    %655 = vmatprep.subr.mxu0 0.0
    %656 = vmatpush1.xpose.msra.mxu0 0.0
    %657 = vmatprep.subr.mxu0 0.0
    %658 = vmatpush1.xpose.msra.mxu0 0.0
    %659 = vmatprep.subr.mxu0 0.0
    %660 = vmatpush1.xpose.msra.mxu0 0.0
    %661 = vmatprep.subr.mxu0 0.0
    %662 = vmatpush1.xpose.msra.mxu0 0.0
    %663 = vmatprep.subr.mxu0 0.0
    %664 = vmatpush1.xpose.msra.mxu0 0.0
    %665 = vmatprep.subr.mxu0 0.0
    %666 = vmatpush1.xpose.msra.mxu0 0.0
    %667 = vmatprep.subr.mxu0 0.0
    %668 = vmatpush1.xpose.msra.mxu0 0.0
    %669 = vmatprep.subr.mxu0 0.0
    %670 = vmatpush1.xpose.msra.mxu0 0.0
    %671 = vmatprep.subr.mxu0 0.0
    %672 = vmatpush1.xpose.msra.mxu0 0.0
    %673 = vmatprep.subr.mxu0 0.0
    %674 = vmatpush1.xpose.msra.mxu0 0.0
    %675 = vmatprep.subr.mxu0 0.0
    %676 = vmatpush1.xpose.msra.mxu0 0.0
    %677 = vmatprep.subr.mxu0 0.0
    %678 = vmatpush1.xpose.msra.mxu0 0.0
    %679 = vmatprep.subr.mxu0 0.0
    %680 = vmatpush1.xpose.msra.mxu0 0.0
    %681 = vmatprep.subr.mxu0 0.0
    %682 = vmatpush1.xpose.msra.mxu0 0.0
    %683 = vmatprep.mubr.f32.mxu0 0.0
    %684 = vmatmul.mubr.f32.gmra.mrb[0].mxu0 %v614
    %v685 = vpop.f32.mrb[0].mxu0
    %v686 = vadd.f32 0.0, %v685
    %v687 = vpop.f32.mrb[0].mxu0
    %688 = vdwg.mxu0
    %v689 = vmul.f32 %v154, 0.17677669
    %v690 = vmul.f32 %v230, 0.17677669
    %v691 = vmul.f32 %v306, 0.17677669
    %v692 = vmul.f32 %v382, 0.17677669
    %v693 = vmul.f32 %v458, 0.17677669
    %v694 = vmul.f32 %v534, 0.17677669
    %v695 = vmul.f32 %v610, 0.17677669
    %v696 = vmul.f32 %v686, 0.17677669
    %vm697 = vcmask 64512
    %v698 = vsel %vm697, %v689, -inf
    %699 = vmax.xlane.f32.xlu0 %v698
    %v700 = vpop.xlane.xlu0 %699
    %v701 = vsel %vm697, %v690, -inf
    %702 = vmax.xlane.f32.xlu0 %v701
    %v703 = vpop.xlane.xlu0 %702
    %v704 = vsel %vm697, %v691, -inf
    %705 = vmax.xlane.f32.xlu0 %v704
    %v706 = vpop.xlane.xlu0 %705
    %v707 = vsel %vm697, %v692, -inf
    %708 = vmax.xlane.f32.xlu0 %v707
    %v709 = vpop.xlane.xlu0 %708
    %v710 = vsel %vm697, %v693, -inf
    %711 = vmax.xlane.f32.xlu0 %v710
    %v712 = vpop.xlane.xlu0 %711
    %v713 = vsel %vm697, %v694, -inf
    %714 = vmax.xlane.f32.xlu0 %v713
    %v715 = vpop.xlane.xlu0 %714
    %v716 = vsel %vm697, %v695, -inf
    %717 = vmax.xlane.f32.xlu0 %v716
    %v718 = vpop.xlane.xlu0 %717
    %v719 = vsel %vm697, %v696, -inf
    %720 = vmax.xlane.f32.xlu0 %v719
    %v721 = vpop.xlane.xlu0 %720
    %v722 = vsub.f32 %v689, %v700
    %v723 = vsub.f32 %v690, %v703
    %v724 = vsub.f32 %v691, %v706
    %v725 = vsub.f32 %v692, %v709
    %v726 = vsub.f32 %v693, %v712
    %v727 = vsub.f32 %v694, %v715
    %v728 = vsub.f32 %v695, %v718
    %v729 = vsub.f32 %v696, %v721
    %v730 = vmul.f32 %v722, 1.442695
    %v731 = vpow.pop %v730
    %v732 = vmul.f32 %v723, 1.442695
    %v733 = vpow.pop %v732
    %v734 = vmul.f32 %v724, 1.442695
    %v735 = vpow.pop %v734
    %v736 = vmul.f32 %v725, 1.442695
    %v737 = vpow.pop %v736
    %v738 = vmul.f32 %v726, 1.442695
    %v739 = vpow.pop %v738
    %v740 = vmul.f32 %v727, 1.442695
    %v741 = vpow.pop %v740
    %v742 = vmul.f32 %v728, 1.442695
    %v743 = vpow.pop %v742
    %v744 = vmul.f32 %v729, 1.442695
    %v745 = vpow.pop %v744
    %v746 = vsel %vm697, %v731, 0.0
    %747 = vadd.xlane.f32.xlu0 %v746
    %v748 = vpop.xlane.xlu0 %747
    %v749 = vsel %vm697, %v733, 0.0
    %750 = vadd.xlane.f32.xlu0 %v749
    %v751 = vpop.xlane.xlu0 %750
    %v752 = vsel %vm697, %v735, 0.0
    %753 = vadd.xlane.f32.xlu0 %v752
    %v754 = vpop.xlane.xlu0 %753
    %v755 = vsel %vm697, %v737, 0.0
    %756 = vadd.xlane.f32.xlu0 %v755
    %v757 = vpop.xlane.xlu0 %756
    %v758 = vsel %vm697, %v739, 0.0
    %759 = vadd.xlane.f32.xlu0 %v758
    %v760 = vpop.xlane.xlu0 %759
    %v761 = vsel %vm697, %v741, 0.0
    %762 = vadd.xlane.f32.xlu0 %v761
    %v763 = vpop.xlane.xlu0 %762
    %v764 = vsel %vm697, %v743, 0.0
    %765 = vadd.xlane.f32.xlu0 %v764
    %v766 = vpop.xlane.xlu0 %765
    %v767 = vsel %vm697, %v745, 0.0
    %768 = vadd.xlane.f32.xlu0 %v767
    %v769 = vpop.xlane.xlu0 %768
    %v771 = vsel %vm697, %v731, 0
    %773 = vmatprep.subr.mxu0 0.0
    %774 = vmatpush1.msra.mxu0 %v72
    %775 = vmatprep.subr.mxu0 0.0
    %776 = vmatpush1.msra.mxu0 0.0
    %777 = vmatprep.subr.mxu0 0.0
    %778 = vmatpush1.msra.mxu0 0.0
    %779 = vmatprep.subr.mxu0 0.0
    %780 = vmatpush1.msra.mxu0 0.0
    %781 = vmatprep.subr.mxu0 0.0
    %782 = vmatpush1.msra.mxu0 0.0
    %783 = vmatprep.subr.mxu0 0.0
    %784 = vmatpush1.msra.mxu0 0.0
    %785 = vmatprep.subr.mxu0 0.0
    %786 = vmatpush1.msra.mxu0 0.0
    %787 = vmatprep.subr.mxu0 0.0
    %788 = vmatpush1.msra.mxu0 0.0
    %789 = vmatprep.subr.mxu0 0.0
    %790 = vmatpush1.msra.mxu0 0.0
    %791 = vmatprep.subr.mxu0 0.0
    %792 = vmatpush1.msra.mxu0 0.0
    %793 = vmatprep.subr.mxu0 0.0
    %794 = vmatpush1.msra.mxu0 0.0
    %795 = vmatprep.subr.mxu0 0.0
    %796 = vmatpush1.msra.mxu0 0.0
    %797 = vmatprep.subr.mxu0 0.0
    %798 = vmatpush1.msra.mxu0 0.0
    %799 = vmatprep.subr.mxu0 0.0
    %800 = vmatpush1.msra.mxu0 0.0
    %801 = vmatprep.subr.mxu0 0.0
    %802 = vmatpush1.msra.mxu0 0.0
    %803 = vmatprep.subr.mxu0 0.0
    %804 = vmatpush1.msra.mxu0 0.0
    %805 = vmatprep.subr.mxu0 0.0
    %806 = vmatpush1.msra.mxu0 0.0
    %807 = vmatprep.subr.mxu0 0.0
    %808 = vmatpush1.msra.mxu0 0.0
    %809 = vmatprep.subr.mxu0 0.0
    %810 = vmatpush1.msra.mxu0 0.0
    %811 = vmatprep.subr.mxu0 0.0
    %812 = vmatpush1.msra.mxu0 0.0
    %813 = vmatprep.subr.mxu0 0.0
    %814 = vmatpush1.msra.mxu0 0.0
    %815 = vmatprep.subr.mxu0 0.0
    %816 = vmatpush1.msra.mxu0 0.0
    %817 = vmatprep.subr.mxu0 0.0
    %818 = vmatpush1.msra.mxu0 0.0
    %819 = vmatprep.subr.mxu0 0.0
    %820 = vmatpush1.msra.mxu0 0.0
    %821 = vmatprep.subr.mxu0 0.0
    %822 = vmatpush1.msra.mxu0 0.0
    %823 = vmatprep.subr.mxu0 0.0
    %824 = vmatpush1.msra.mxu0 0.0
    %825 = vmatprep.subr.mxu0 0.0
    %826 = vmatpush1.msra.mxu0 0.0
    %827 = vmatprep.subr.mxu0 0.0
    %828 = vmatpush1.msra.mxu0 0.0
    %829 = vmatprep.subr.mxu0 0.0
    %830 = vmatpush1.msra.mxu0 0.0
    %831 = vmatprep.subr.mxu0 0.0
    %832 = vmatpush1.msra.mxu0 0.0
    %833 = vmatprep.subr.mxu0 0.0
    %834 = vmatpush1.msra.mxu0 0.0
    %835 = vmatprep.subr.mxu0 0.0
    %836 = vmatpush1.msra.mxu0 0.0
    %837 = vmatprep.mubr.f32.mxu0 0.0
    %838 = vmatmul.mubr.f32.gmra.mrb[0].mxu0 %v771
    %v839 = vpop.f32.mrb[0].mxu0
    %v840 = vadd.f32 0.0, %v839
    %v841 = vpop.f32.mrb[0].mxu0
    %842 = vdwg.mxu0
    %v844 = vsel %vm697, %v733, 0
    %846 = vmatprep.subr.mxu0 0.0
    %847 = vmatpush1.msra.mxu0 %v73
    %848 = vmatprep.subr.mxu0 0.0
    %849 = vmatpush1.msra.mxu0 0.0
    %850 = vmatprep.subr.mxu0 0.0
    %851 = vmatpush1.msra.mxu0 0.0
    %852 = vmatprep.subr.mxu0 0.0
    %853 = vmatpush1.msra.mxu0 0.0
    %854 = vmatprep.subr.mxu0 0.0
    %855 = vmatpush1.msra.mxu0 0.0
    %856 = vmatprep.subr.mxu0 0.0
    %857 = vmatpush1.msra.mxu0 0.0
    %858 = vmatprep.subr.mxu0 0.0
    %859 = vmatpush1.msra.mxu0 0.0
    %860 = vmatprep.subr.mxu0 0.0
    %861 = vmatpush1.msra.mxu0 0.0
    %862 = vmatprep.subr.mxu0 0.0
    %863 = vmatpush1.msra.mxu0 0.0
    %864 = vmatprep.subr.mxu0 0.0
    %865 = vmatpush1.msra.mxu0 0.0
    %866 = vmatprep.subr.mxu0 0.0
    %867 = vmatpush1.msra.mxu0 0.0
    %868 = vmatprep.subr.mxu0 0.0
    %869 = vmatpush1.msra.mxu0 0.0
    %870 = vmatprep.subr.mxu0 0.0
    %871 = vmatpush1.msra.mxu0 0.0
    %872 = vmatprep.subr.mxu0 0.0
    %873 = vmatpush1.msra.mxu0 0.0
    %874 = vmatprep.subr.mxu0 0.0
    %875 = vmatpush1.msra.mxu0 0.0
    %876 = vmatprep.subr.mxu0 0.0
    %877 = vmatpush1.msra.mxu0 0.0
    %878 = vmatprep.subr.mxu0 0.0
    %879 = vmatpush1.msra.mxu0 0.0
    %880 = vmatprep.subr.mxu0 0.0
    %881 = vmatpush1.msra.mxu0 0.0
    %882 = vmatprep.subr.mxu0 0.0
    %883 = vmatpush1.msra.mxu0 0.0
    %884 = vmatprep.subr.mxu0 0.0
    %885 = vmatpush1.msra.mxu0 0.0
    %886 = vmatprep.subr.mxu0 0.0
    %887 = vmatpush1.msra.mxu0 0.0
    %888 = vmatprep.subr.mxu0 0.0
    %889 = vmatpush1.msra.mxu0 0.0
    %890 = vmatprep.subr.mxu0 0.0
    %891 = vmatpush1.msra.mxu0 0.0
    %892 = vmatprep.subr.mxu0 0.0
    %893 = vmatpush1.msra.mxu0 0.0
    %894 = vmatprep.subr.mxu0 0.0
    %895 = vmatpush1.msra.mxu0 0.0
    %896 = vmatprep.subr.mxu0 0.0
    %897 = vmatpush1.msra.mxu0 0.0
    %898 = vmatprep.subr.mxu0 0.0
    %899 = vmatpush1.msra.mxu0 0.0
    %900 = vmatprep.subr.mxu0 0.0
    %901 = vmatpush1.msra.mxu0 0.0
    %902 = vmatprep.subr.mxu0 0.0
    %903 = vmatpush1.msra.mxu0 0.0
    %904 = vmatprep.subr.mxu0 0.0
    %905 = vmatpush1.msra.mxu0 0.0
    %906 = vmatprep.subr.mxu0 0.0
    %907 = vmatpush1.msra.mxu0 0.0
    %908 = vmatprep.subr.mxu0 0.0
    %909 = vmatpush1.msra.mxu0 0.0
    %910 = vmatprep.mubr.f32.mxu0 0.0
    %911 = vmatmul.mubr.f32.gmra.mrb[0].mxu0 %v844
    %v912 = vpop.f32.mrb[0].mxu0
    %v913 = vadd.f32 0.0, %v912
    %v914 = vpop.f32.mrb[0].mxu0
    %915 = vdwg.mxu0
    %v917 = vsel %vm697, %v735, 0
    %919 = vmatprep.subr.mxu0 0.0
    %920 = vmatpush1.msra.mxu0 %v74
    %921 = vmatprep.subr.mxu0 0.0
    %922 = vmatpush1.msra.mxu0 0.0
    %923 = vmatprep.subr.mxu0 0.0
    %924 = vmatpush1.msra.mxu0 0.0
    %925 = vmatprep.subr.mxu0 0.0
    %926 = vmatpush1.msra.mxu0 0.0
    %927 = vmatprep.subr.mxu0 0.0
    %928 = vmatpush1.msra.mxu0 0.0
    %929 = vmatprep.subr.mxu0 0.0
    %930 = vmatpush1.msra.mxu0 0.0
    %931 = vmatprep.subr.mxu0 0.0
    %932 = vmatpush1.msra.mxu0 0.0
    %933 = vmatprep.subr.mxu0 0.0
    %934 = vmatpush1.msra.mxu0 0.0
    %935 = vmatprep.subr.mxu0 0.0
    %936 = vmatpush1.msra.mxu0 0.0
    %937 = vmatprep.subr.mxu0 0.0
    %938 = vmatpush1.msra.mxu0 0.0
    %939 = vmatprep.subr.mxu0 0.0
    %940 = vmatpush1.msra.mxu0 0.0
    %941 = vmatprep.subr.mxu0 0.0
    %942 = vmatpush1.msra.mxu0 0.0
    %943 = vmatprep.subr.mxu0 0.0
    %944 = vmatpush1.msra.mxu0 0.0
    %945 = vmatprep.subr.mxu0 0.0
    %946 = vmatpush1.msra.mxu0 0.0
    %947 = vmatprep.subr.mxu0 0.0
    %948 = vmatpush1.msra.mxu0 0.0
    %949 = vmatprep.subr.mxu0 0.0
    %950 = vmatpush1.msra.mxu0 0.0
    %951 = vmatprep.subr.mxu0 0.0
    %952 = vmatpush1.msra.mxu0 0.0
    %953 = vmatprep.subr.mxu0 0.0
    %954 = vmatpush1.msra.mxu0 0.0
    %955 = vmatprep.subr.mxu0 0.0
    %956 = vmatpush1.msra.mxu0 0.0
    %957 = vmatprep.subr.mxu0 0.0
    %958 = vmatpush1.msra.mxu0 0.0
    %959 = vmatprep.subr.mxu0 0.0
    %960 = vmatpush1.msra.mxu0 0.0
    %961 = vmatprep.subr.mxu0 0.0
    %962 = vmatpush1.msra.mxu0 0.0
    %963 = vmatprep.subr.mxu0 0.0
    %964 = vmatpush1.msra.mxu0 0.0
    %965 = vmatprep.subr.mxu0 0.0
    %966 = vmatpush1.msra.mxu0 0.0
    %967 = vmatprep.subr.mxu0 0.0
    %968 = vmatpush1.msra.mxu0 0.0
    %969 = vmatprep.subr.mxu0 0.0
    %970 = vmatpush1.msra.mxu0 0.0
    %971 = vmatprep.subr.mxu0 0.0
    %972 = vmatpush1.msra.mxu0 0.0
    %973 = vmatprep.subr.mxu0 0.0
    %974 = vmatpush1.msra.mxu0 0.0
    %975 = vmatprep.subr.mxu0 0.0
    %976 = vmatpush1.msra.mxu0 0.0
    %977 = vmatprep.subr.mxu0 0.0
    %978 = vmatpush1.msra.mxu0 0.0
    %979 = vmatprep.subr.mxu0 0.0
    %980 = vmatpush1.msra.mxu0 0.0
    %981 = vmatprep.subr.mxu0 0.0
    %982 = vmatpush1.msra.mxu0 0.0
    %983 = vmatprep.mubr.f32.mxu0 0.0
    %984 = vmatmul.mubr.f32.gmra.mrb[0].mxu0 %v917
    %v985 = vpop.f32.mrb[0].mxu0
    %v986 = vadd.f32 0.0, %v985
    %v987 = vpop.f32.mrb[0].mxu0
    %988 = vdwg.mxu0
    %v990 = vsel %vm697, %v737, 0
    %992 = vmatprep.subr.mxu0 0.0
    %993 = vmatpush1.msra.mxu0 %v75
    %994 = vmatprep.subr.mxu0 0.0
    %995 = vmatpush1.msra.mxu0 0.0
    %996 = vmatprep.subr.mxu0 0.0
    %997 = vmatpush1.msra.mxu0 0.0
    %998 = vmatprep.subr.mxu0 0.0
    %999 = vmatpush1.msra.mxu0 0.0
    %1000 = vmatprep.subr.mxu0 0.0
    %1001 = vmatpush1.msra.mxu0 0.0
    %1002 = vmatprep.subr.mxu0 0.0
    %1003 = vmatpush1.msra.mxu0 0.0
    %1004 = vmatprep.subr.mxu0 0.0
    %1005 = vmatpush1.msra.mxu0 0.0
    %1006 = vmatprep.subr.mxu0 0.0
    %1007 = vmatpush1.msra.mxu0 0.0
    %1008 = vmatprep.subr.mxu0 0.0
    %1009 = vmatpush1.msra.mxu0 0.0
    %1010 = vmatprep.subr.mxu0 0.0
    %1011 = vmatpush1.msra.mxu0 0.0
    %1012 = vmatprep.subr.mxu0 0.0
    %1013 = vmatpush1.msra.mxu0 0.0
    %1014 = vmatprep.subr.mxu0 0.0
    %1015 = vmatpush1.msra.mxu0 0.0
    %1016 = vmatprep.subr.mxu0 0.0
    %1017 = vmatpush1.msra.mxu0 0.0
    %1018 = vmatprep.subr.mxu0 0.0
    %1019 = vmatpush1.msra.mxu0 0.0
    %1020 = vmatprep.subr.mxu0 0.0
    %1021 = vmatpush1.msra.mxu0 0.0
    %1022 = vmatprep.subr.mxu0 0.0
    %1023 = vmatpush1.msra.mxu0 0.0
    %1024 = vmatprep.subr.mxu0 0.0
    %1025 = vmatpush1.msra.mxu0 0.0
    %1026 = vmatprep.subr.mxu0 0.0
    %1027 = vmatpush1.msra.mxu0 0.0
    %1028 = vmatprep.subr.mxu0 0.0
    %1029 = vmatpush1.msra.mxu0 0.0
    %1030 = vmatprep.subr.mxu0 0.0
    %1031 = vmatpush1.msra.mxu0 0.0
    %1032 = vmatprep.subr.mxu0 0.0
    %1033 = vmatpush1.msra.mxu0 0.0
    %1034 = vmatprep.subr.mxu0 0.0
    %1035 = vmatpush1.msra.mxu0 0.0
    %1036 = vmatprep.subr.mxu0 0.0
    %1037 = vmatpush1.msra.mxu0 0.0
    %1038 = vmatprep.subr.mxu0 0.0
    %1039 = vmatpush1.msra.mxu0 0.0
    %1040 = vmatprep.subr.mxu0 0.0
    %1041 = vmatpush1.msra.mxu0 0.0
    %1042 = vmatprep.subr.mxu0 0.0
    %1043 = vmatpush1.msra.mxu0 0.0
    %1044 = vmatprep.subr.mxu0 0.0
    %1045 = vmatpush1.msra.mxu0 0.0
    %1046 = vmatprep.subr.mxu0 0.0
    %1047 = vmatpush1.msra.mxu0 0.0
    %1048 = vmatprep.subr.mxu0 0.0
    %1049 = vmatpush1.msra.mxu0 0.0
    %1050 = vmatprep.subr.mxu0 0.0
    %1051 = vmatpush1.msra.mxu0 0.0
    %1052 = vmatprep.subr.mxu0 0.0
    %1053 = vmatpush1.msra.mxu0 0.0
    %1054 = vmatprep.subr.mxu0 0.0
    %1055 = vmatpush1.msra.mxu0 0.0
    %1056 = vmatprep.mubr.f32.mxu0 0.0
    %1057 = vmatmul.mubr.f32.gmra.mrb[0].mxu0 %v990
    %v1058 = vpop.f32.mrb[0].mxu0
    %v1059 = vadd.f32 0.0, %v1058
    %v1060 = vpop.f32.mrb[0].mxu0
    %1061 = vdwg.mxu0
    %v1063 = vsel %vm697, %v739, 0
    %1065 = vmatprep.subr.mxu0 0.0
    %1066 = vmatpush1.msra.mxu0 %v76
    %1067 = vmatprep.subr.mxu0 0.0
    %1068 = vmatpush1.msra.mxu0 0.0
    %1069 = vmatprep.subr.mxu0 0.0
    %1070 = vmatpush1.msra.mxu0 0.0
    %1071 = vmatprep.subr.mxu0 0.0
    %1072 = vmatpush1.msra.mxu0 0.0
    %1073 = vmatprep.subr.mxu0 0.0
    %1074 = vmatpush1.msra.mxu0 0.0
    %1075 = vmatprep.subr.mxu0 0.0
    %1076 = vmatpush1.msra.mxu0 0.0
    %1077 = vmatprep.subr.mxu0 0.0
    %1078 = vmatpush1.msra.mxu0 0.0
    %1079 = vmatprep.subr.mxu0 0.0
    %1080 = vmatpush1.msra.mxu0 0.0
    %1081 = vmatprep.subr.mxu0 0.0
    %1082 = vmatpush1.msra.mxu0 0.0
    %1083 = vmatprep.subr.mxu0 0.0
    %1084 = vmatpush1.msra.mxu0 0.0
    %1085 = vmatprep.subr.mxu0 0.0
    %1086 = vmatpush1.msra.mxu0 0.0
    %1087 = vmatprep.subr.mxu0 0.0
    %1088 = vmatpush1.msra.mxu0 0.0
    %1089 = vmatprep.subr.mxu0 0.0
    %1090 = vmatpush1.msra.mxu0 0.0
    %1091 = vmatprep.subr.mxu0 0.0
    %1092 = vmatpush1.msra.mxu0 0.0
    %1093 = vmatprep.subr.mxu0 0.0
    %1094 = vmatpush1.msra.mxu0 0.0
    %1095 = vmatprep.subr.mxu0 0.0
    %1096 = vmatpush1.msra.mxu0 0.0
    %1097 = vmatprep.subr.mxu0 0.0
    %1098 = vmatpush1.msra.mxu0 0.0
    %1099 = vmatprep.subr.mxu0 0.0
    %1100 = vmatpush1.msra.mxu0 0.0
    %1101 = vmatprep.subr.mxu0 0.0
    %1102 = vmatpush1.msra.mxu0 0.0
    %1103 = vmatprep.subr.mxu0 0.0
    %1104 = vmatpush1.msra.mxu0 0.0
    %1105 = vmatprep.subr.mxu0 0.0
    %1106 = vmatpush1.msra.mxu0 0.0
    %1107 = vmatprep.subr.mxu0 0.0
    %1108 = vmatpush1.msra.mxu0 0.0
    %1109 = vmatprep.subr.mxu0 0.0
    %1110 = vmatpush1.msra.mxu0 0.0
    %1111 = vmatprep.subr.mxu0 0.0
    %1112 = vmatpush1.msra.mxu0 0.0
    %1113 = vmatprep.subr.mxu0 0.0
    %1114 = vmatpush1.msra.mxu0 0.0
    %1115 = vmatprep.subr.mxu0 0.0
    %1116 = vmatpush1.msra.mxu0 0.0
    %1117 = vmatprep.subr.mxu0 0.0
    %1118 = vmatpush1.msra.mxu0 0.0
    %1119 = vmatprep.subr.mxu0 0.0
    %1120 = vmatpush1.msra.mxu0 0.0
    %1121 = vmatprep.subr.mxu0 0.0
    %1122 = vmatpush1.msra.mxu0 0.0
    %1123 = vmatprep.subr.mxu0 0.0
    %1124 = vmatpush1.msra.mxu0 0.0
    %1125 = vmatprep.subr.mxu0 0.0
    %1126 = vmatpush1.msra.mxu0 0.0
    %1127 = vmatprep.subr.mxu0 0.0
    %1128 = vmatpush1.msra.mxu0 0.0
    %1129 = vmatprep.mubr.f32.mxu0 0.0
    %1130 = vmatmul.mubr.f32.gmra.mrb[0].mxu0 %v1063
    %v1131 = vpop.f32.mrb[0].mxu0
    %v1132 = vadd.f32 0.0, %v1131
    %v1133 = vpop.f32.mrb[0].mxu0
    %1134 = vdwg.mxu0
    %v1136 = vsel %vm697, %v741, 0
    %1138 = vmatprep.subr.mxu0 0.0
    %1139 = vmatpush1.msra.mxu0 %v77
    %1140 = vmatprep.subr.mxu0 0.0
    %1141 = vmatpush1.msra.mxu0 0.0
    %1142 = vmatprep.subr.mxu0 0.0
    %1143 = vmatpush1.msra.mxu0 0.0
    %1144 = vmatprep.subr.mxu0 0.0
    %1145 = vmatpush1.msra.mxu0 0.0
    %1146 = vmatprep.subr.mxu0 0.0
    %1147 = vmatpush1.msra.mxu0 0.0
    %1148 = vmatprep.subr.mxu0 0.0
    %1149 = vmatpush1.msra.mxu0 0.0
    %1150 = vmatprep.subr.mxu0 0.0
    %1151 = vmatpush1.msra.mxu0 0.0
    %1152 = vmatprep.subr.mxu0 0.0
    %1153 = vmatpush1.msra.mxu0 0.0
    %1154 = vmatprep.subr.mxu0 0.0
    %1155 = vmatpush1.msra.mxu0 0.0
    %1156 = vmatprep.subr.mxu0 0.0
    %1157 = vmatpush1.msra.mxu0 0.0
    %1158 = vmatprep.subr.mxu0 0.0
    %1159 = vmatpush1.msra.mxu0 0.0
    %1160 = vmatprep.subr.mxu0 0.0
    %1161 = vmatpush1.msra.mxu0 0.0
    %1162 = vmatprep.subr.mxu0 0.0
    %1163 = vmatpush1.msra.mxu0 0.0
    %1164 = vmatprep.subr.mxu0 0.0
    %1165 = vmatpush1.msra.mxu0 0.0
    %1166 = vmatprep.subr.mxu0 0.0
    %1167 = vmatpush1.msra.mxu0 0.0
    %1168 = vmatprep.subr.mxu0 0.0
    %1169 = vmatpush1.msra.mxu0 0.0
    %1170 = vmatprep.subr.mxu0 0.0
    %1171 = vmatpush1.msra.mxu0 0.0
    %1172 = vmatprep.subr.mxu0 0.0
    %1173 = vmatpush1.msra.mxu0 0.0
    %1174 = vmatprep.subr.mxu0 0.0
    %1175 = vmatpush1.msra.mxu0 0.0
    %1176 = vmatprep.subr.mxu0 0.0
    %1177 = vmatpush1.msra.mxu0 0.0
    %1178 = vmatprep.subr.mxu0 0.0
    %1179 = vmatpush1.msra.mxu0 0.0
    %1180 = vmatprep.subr.mxu0 0.0
    %1181 = vmatpush1.msra.mxu0 0.0
    %1182 = vmatprep.subr.mxu0 0.0
    %1183 = vmatpush1.msra.mxu0 0.0
    %1184 = vmatprep.subr.mxu0 0.0
    %1185 = vmatpush1.msra.mxu0 0.0
    %1186 = vmatprep.subr.mxu0 0.0
    %1187 = vmatpush1.msra.mxu0 0.0
    %1188 = vmatprep.subr.mxu0 0.0
    %1189 = vmatpush1.msra.mxu0 0.0
    %1190 = vmatprep.subr.mxu0 0.0
    %1191 = vmatpush1.msra.mxu0 0.0
    %1192 = vmatprep.subr.mxu0 0.0
    %1193 = vmatpush1.msra.mxu0 0.0
    %1194 = vmatprep.subr.mxu0 0.0
    %1195 = vmatpush1.msra.mxu0 0.0
    %1196 = vmatprep.subr.mxu0 0.0
    %1197 = vmatpush1.msra.mxu0 0.0
    %1198 = vmatprep.subr.mxu0 0.0
    %1199 = vmatpush1.msra.mxu0 0.0
    %1200 = vmatprep.subr.mxu0 0.0
    %1201 = vmatpush1.msra.mxu0 0.0
    %1202 = vmatprep.mubr.f32.mxu0 0.0
    %1203 = vmatmul.mubr.f32.gmra.mrb[0].mxu0 %v1136
    %v1204 = vpop.f32.mrb[0].mxu0
    %v1205 = vadd.f32 0.0, %v1204
    %v1206 = vpop.f32.mrb[0].mxu0
    %1207 = vdwg.mxu0
    %v1209 = vsel %vm697, %v743, 0
    %1211 = vmatprep.subr.mxu0 0.0
    %1212 = vmatpush1.msra.mxu0 %v78
    %1213 = vmatprep.subr.mxu0 0.0
    %1214 = vmatpush1.msra.mxu0 0.0
    %1215 = vmatprep.subr.mxu0 0.0
    %1216 = vmatpush1.msra.mxu0 0.0
    %1217 = vmatprep.subr.mxu0 0.0
    %1218 = vmatpush1.msra.mxu0 0.0
    %1219 = vmatprep.subr.mxu0 0.0
    %1220 = vmatpush1.msra.mxu0 0.0
    %1221 = vmatprep.subr.mxu0 0.0
    %1222 = vmatpush1.msra.mxu0 0.0
    %1223 = vmatprep.subr.mxu0 0.0
    %1224 = vmatpush1.msra.mxu0 0.0
    %1225 = vmatprep.subr.mxu0 0.0
    %1226 = vmatpush1.msra.mxu0 0.0
    %1227 = vmatprep.subr.mxu0 0.0
    %1228 = vmatpush1.msra.mxu0 0.0
    %1229 = vmatprep.subr.mxu0 0.0
    %1230 = vmatpush1.msra.mxu0 0.0
    %1231 = vmatprep.subr.mxu0 0.0
    %1232 = vmatpush1.msra.mxu0 0.0
    %1233 = vmatprep.subr.mxu0 0.0
    %1234 = vmatpush1.msra.mxu0 0.0
    %1235 = vmatprep.subr.mxu0 0.0
    %1236 = vmatpush1.msra.mxu0 0.0
    %1237 = vmatprep.subr.mxu0 0.0
    %1238 = vmatpush1.msra.mxu0 0.0
    %1239 = vmatprep.subr.mxu0 0.0
    %1240 = vmatpush1.msra.mxu0 0.0
    %1241 = vmatprep.subr.mxu0 0.0
    %1242 = vmatpush1.msra.mxu0 0.0
    %1243 = vmatprep.subr.mxu0 0.0
    %1244 = vmatpush1.msra.mxu0 0.0
    %1245 = vmatprep.subr.mxu0 0.0
    %1246 = vmatpush1.msra.mxu0 0.0
    %1247 = vmatprep.subr.mxu0 0.0
    %1248 = vmatpush1.msra.mxu0 0.0
    %1249 = vmatprep.subr.mxu0 0.0
    %1250 = vmatpush1.msra.mxu0 0.0
    %1251 = vmatprep.subr.mxu0 0.0
    %1252 = vmatpush1.msra.mxu0 0.0
    %1253 = vmatprep.subr.mxu0 0.0
    %1254 = vmatpush1.msra.mxu0 0.0
    %1255 = vmatprep.subr.mxu0 0.0
    %1256 = vmatpush1.msra.mxu0 0.0
    %1257 = vmatprep.subr.mxu0 0.0
    %1258 = vmatpush1.msra.mxu0 0.0
    %1259 = vmatprep.subr.mxu0 0.0
    %1260 = vmatpush1.msra.mxu0 0.0
    %1261 = vmatprep.subr.mxu0 0.0
    %1262 = vmatpush1.msra.mxu0 0.0
    %1263 = vmatprep.subr.mxu0 0.0
    %1264 = vmatpush1.msra.mxu0 0.0
    %1265 = vmatprep.subr.mxu0 0.0
    %1266 = vmatpush1.msra.mxu0 0.0
    %1267 = vmatprep.subr.mxu0 0.0
    %1268 = vmatpush1.msra.mxu0 0.0
    %1269 = vmatprep.subr.mxu0 0.0
    %1270 = vmatpush1.msra.mxu0 0.0
    %1271 = vmatprep.subr.mxu0 0.0
    %1272 = vmatpush1.msra.mxu0 0.0
    %1273 = vmatprep.subr.mxu0 0.0
    %1274 = vmatpush1.msra.mxu0 0.0
    %1275 = vmatprep.mubr.f32.mxu0 0.0
    %1276 = vmatmul.mubr.f32.gmra.mrb[0].mxu0 %v1209
    %v1277 = vpop.f32.mrb[0].mxu0
    %v1278 = vadd.f32 0.0, %v1277
    %v1279 = vpop.f32.mrb[0].mxu0
    %1280 = vdwg.mxu0
    %v1282 = vsel %vm697, %v745, 0
    %1284 = vmatprep.subr.mxu0 0.0
    %1285 = vmatpush1.msra.mxu0 %v79
    %1286 = vmatprep.subr.mxu0 0.0
    %1287 = vmatpush1.msra.mxu0 0.0
    %1288 = vmatprep.subr.mxu0 0.0
    %1289 = vmatpush1.msra.mxu0 0.0
    %1290 = vmatprep.subr.mxu0 0.0
    %1291 = vmatpush1.msra.mxu0 0.0
    %1292 = vmatprep.subr.mxu0 0.0
    %1293 = vmatpush1.msra.mxu0 0.0
    %1294 = vmatprep.subr.mxu0 0.0
    %1295 = vmatpush1.msra.mxu0 0.0
    %1296 = vmatprep.subr.mxu0 0.0
    %1297 = vmatpush1.msra.mxu0 0.0
    %1298 = vmatprep.subr.mxu0 0.0
    %1299 = vmatpush1.msra.mxu0 0.0
    %1300 = vmatprep.subr.mxu0 0.0
    %1301 = vmatpush1.msra.mxu0 0.0
    %1302 = vmatprep.subr.mxu0 0.0
    %1303 = vmatpush1.msra.mxu0 0.0
    %1304 = vmatprep.subr.mxu0 0.0
    %1305 = vmatpush1.msra.mxu0 0.0
    %1306 = vmatprep.subr.mxu0 0.0
    %1307 = vmatpush1.msra.mxu0 0.0
    %1308 = vmatprep.subr.mxu0 0.0
    %1309 = vmatpush1.msra.mxu0 0.0
    %1310 = vmatprep.subr.mxu0 0.0
    %1311 = vmatpush1.msra.mxu0 0.0
    %1312 = vmatprep.subr.mxu0 0.0
    %1313 = vmatpush1.msra.mxu0 0.0
    %1314 = vmatprep.subr.mxu0 0.0
    %1315 = vmatpush1.msra.mxu0 0.0
    %1316 = vmatprep.subr.mxu0 0.0
    %1317 = vmatpush1.msra.mxu0 0.0
    %1318 = vmatprep.subr.mxu0 0.0
    %1319 = vmatpush1.msra.mxu0 0.0
    %1320 = vmatprep.subr.mxu0 0.0
    %1321 = vmatpush1.msra.mxu0 0.0
    %1322 = vmatprep.subr.mxu0 0.0
    %1323 = vmatpush1.msra.mxu0 0.0
    %1324 = vmatprep.subr.mxu0 0.0
    %1325 = vmatpush1.msra.mxu0 0.0
    %1326 = vmatprep.subr.mxu0 0.0
    %1327 = vmatpush1.msra.mxu0 0.0
    %1328 = vmatprep.subr.mxu0 0.0
    %1329 = vmatpush1.msra.mxu0 0.0
    %1330 = vmatprep.subr.mxu0 0.0
    %1331 = vmatpush1.msra.mxu0 0.0
    %1332 = vmatprep.subr.mxu0 0.0
    %1333 = vmatpush1.msra.mxu0 0.0
    %1334 = vmatprep.subr.mxu0 0.0
    %1335 = vmatpush1.msra.mxu0 0.0
    %1336 = vmatprep.subr.mxu0 0.0
    %1337 = vmatpush1.msra.mxu0 0.0
    %1338 = vmatprep.subr.mxu0 0.0
    %1339 = vmatpush1.msra.mxu0 0.0
    %1340 = vmatprep.subr.mxu0 0.0
    %1341 = vmatpush1.msra.mxu0 0.0
    %1342 = vmatprep.subr.mxu0 0.0
    %1343 = vmatpush1.msra.mxu0 0.0
    %1344 = vmatprep.subr.mxu0 0.0
    %1345 = vmatpush1.msra.mxu0 0.0
    %1346 = vmatprep.subr.mxu0 0.0
    %1347 = vmatpush1.msra.mxu0 0.0
    %1348 = vmatprep.mubr.f32.mxu0 0.0
    %1349 = vmatmul.mubr.f32.gmra.mrb[0].mxu0 %v1282
    %v1350 = vpop.f32.mrb[0].mxu0
    %v1351 = vadd.f32 0.0, %v1350
    %v1352 = vpop.f32.mrb[0].mxu0
    %1353 = vdwg.mxu0
    %v1354 = vrcp.pop %v748
    %v1355 = vrcp.pop %v751
    %v1356 = vrcp.pop %v754
    %v1357 = vrcp.pop %v757
    %v1358 = vrcp.pop %v760
    %v1359 = vrcp.pop %v763
    %v1360 = vrcp.pop %v766
    %v1361 = vrcp.pop %v769
    %v1362 = vmul.f32 %v840, %v1354
    %v1363 = vmul.f32 %v913, %v1355
    %v1364 = vmul.f32 %v986, %v1356
    %v1365 = vmul.f32 %v1059, %v1357
    %v1366 = vmul.f32 %v1132, %v1358
    %v1367 = vmul.f32 %v1205, %v1359
    %v1368 = vmul.f32 %v1278, %v1360
    %v1369 = vmul.f32 %v1351, %v1361
    %1370 = vst.msk [vmem:[#allocation8] sm:$0xff] %vm80, %v1362
    %1371 = vst.msk [vmem:[#allocation8 + $0x8] sm:$0xff] %vm80, %v1363
    %1372 = vst.msk [vmem:[#allocation8 + $0x10] sm:$0xff] %vm80, %v1364
    %1373 = vst.msk [vmem:[#allocation8 + $0x18] sm:$0xff] %vm80, %v1365
    %1374 = vst.msk [vmem:[#allocation8 + $0x20] sm:$0xff] %vm80, %v1366
    %1375 = vst.msk [vmem:[#allocation8 + $0x28] sm:$0xff] %vm80, %v1367
    %1376 = vst.msk [vmem:[#allocation8 + $0x30] sm:$0xff] %vm80, %v1368
    %1377 = vst.msk [vmem:[#allocation8 + $0x38] sm:$0xff] %vm80, %v1369
    // Predicated region
    $region26: #{tpu_custom_call.1} parent=1 // pred_check
      _
    $region27: #{tpu_custom_call.1} parent=1 // pred_check_branch
      %1379 = sbr.rel (0) target = $region29
    $region28: #{tpu_custom_call.1} parent=1 // pred_region
      %s1381 = ssub.s32 1024, 1024
      %1382 = vsyncadd [#allocation4], %s1381
      %s1383 = sshll.u32 [#allocation8], 4
      %s1384 = int_to_ptr.vmem [resolvable:$true] %s1383
      %1389 = dma.vmem_to_hbm [thread:$0]  %s1384, 1024, %s3, [#allocation4], 128, 128, 8
    $region29: #{tpu_custom_call.1} parent=1 // pred_fallthru
      _
    // Predicated region
    $region30: #{tpu_custom_call.1} parent=1 // pred_check
      _
    $region31: #{tpu_custom_call.1} parent=1 // pred_check_branch
      %1391 = sbr.rel (0) target = $region33
    $region32: #{tpu_custom_call.1} parent=1 // pred_region
      %1392 = dma.done [#allocation4], 1024
    $region33: #{tpu_custom_call.1} parent=1 // pred_fallthru
      _
    %1393 = vsyncpa [#allocation3], 1
    %1394 = vsyncpa [#allocation6], 1
    %1395 = vsyncpa [#allocation4], 1

</llo_original>
